<compile_context>
chip_gen: v5e
topology: v5e:2x2
jax: 0.10.0
libtpu: 0.0.40
codegen_flags: <defaults>
</compile_context>

<pallas_src>
import functools

import jax
import jax.numpy as jnp
from jax.experimental import pallas as pl
from jax.experimental.pallas import tpu as pltpu


# -----------------------------------------------------------------------------
# Pallas kernel: fc1 + ReLU + single-matmul GRUCell + [LayerNorm] + fc2
# -----------------------------------------------------------------------------
def _agent_kernel(use_layer_norm,
                  x_ref, h_ref,
                  w1_ref, b1_ref,
                  wg_ref, bg_ref,
                  w2_ref, b2_ref,
                  out_ref):
    x = x_ref[...]                        # (NB, E)  raw observations
    h = h_ref[...]                        # (NB, H)
    H = h.shape[-1]

    # fc1 (preprocessing folded into w1 offline) + ReLU
    xr = jnp.maximum(
        jnp.dot(x, w1_ref[...], preferred_element_type=jnp.float32) + b1_ref[...],
        0.0)

    # Fused GRUCell, one matmul.  Gate slab columns (PyTorch gate order r,z,n):
    #   [0:2H)  = xr@Wir + h@Whr | xr@Wiz + h@Whz   (+ bir+bhr | biz+bhz)
    #   [2H:3H) = xr@Win (+ bin)
    #   [3H:4H) = h@Whn  (+ bhn)        (kept separate: gated by r)
    u = jnp.concatenate([xr, h], axis=-1)                                  # (NB, 2H)
    g = jnp.dot(u, wg_ref[...], preferred_element_type=jnp.float32) + bg_ref[...]

    rz = jax.nn.sigmoid(g[:, :2 * H])
    r = rz[:, :H]
    z = rz[:, H:]
    n = jnp.tanh(g[:, 2 * H:3 * H] + r * g[:, 3 * H:])
    hh = (1.0 - z) * n + z * h

    y = hh
    if use_layer_norm:
        # gamma/beta are folded into w2/b2; only the normalization remains.
        mu = jnp.mean(hh, axis=-1, keepdims=True)
        var = jnp.mean((hh - mu) ** 2, axis=-1, keepdims=True)
        y = (hh - mu) * jax.lax.rsqrt(var + 1e-5)

    q = jnp.dot(y, w2_ref[...], preferred_element_type=jnp.float32) + b2_ref[...]

    # Merged output slab [hh | q]: one store, one output DMA stream.
    out_ref[...] = jnp.concatenate([hh, q], axis=-1)


def _rep_spec(arr):
    """BlockSpec covering a whole (small, 2-D) param, replicated across the grid."""
    return pl.BlockSpec(arr.shape, lambda i: (0, 0))


# -----------------------------------------------------------------------------
# Parameter prep (done once, offline): fold preproc into w1, build the
# block-structured GRU weight/bias, fold LayerNorm affine into fc2.
# -----------------------------------------------------------------------------
def prepare_fused_params(params, use_layer_norm=True):
    e1, H = params["w1"].shape
    e = e1 + 1

    # Preprocessing as a linear map T: raw (e,) obs -> preprocessed (e-1,) features.
    T = jnp.zeros((e, e1), jnp.float32)
    T = T.at[0, 0].set(1.0 / 15000.0).at[0, 3].set(-1.0 / 15000.0)
    T = T.at[1, 1].set(1.0 / 15000.0).at[1, 4].set(-1.0 / 15000.0)
    T = T.at[2, 2].set(1.0 / 7500.0)
    T = T.at[3, 3].set(1.0 / 15000.0)
    T = T.at[4, 4].set(1.0 / 15000.0)
    # raw column 5 (scaled /30000 then dropped) contributes nothing.
    if e > 6:
        idx = jnp.arange(6, e)
        T = T.at[idx, idx - 1].set(1.0)
    w1f = T @ params["w1"]                                                  # (e, H)

    # Block-structured GRU weight (2H, 4H) and combined bias (1, 4H).
    zeros = jnp.zeros((H, H), jnp.float32)
    top = jnp.concatenate(
        [params["w_ih"][0], params["w_ih"][1], params["w_ih"][2], zeros], axis=-1)
    bot = jnp.concatenate(
        [params["w_hh"][0], params["w_hh"][1], zeros, params["w_hh"][2]], axis=-1)
    wg = jnp.concatenate([top, bot], axis=0)                                # (2H, 4H)
    bg = jnp.concatenate([params["b_ih"][0] + params["b_hh"][0],
                          params["b_ih"][1] + params["b_hh"][1],
                          params["b_ih"][2],
                          params["b_hh"][2]], axis=-1)                      # (1, 4H)

    # LayerNorm affine folded into fc2: q = LNnorm(hh) @ (diag(gamma)@w2) + (beta@w2 + b2)
    if use_layer_norm:
        w2f = params["w2"] * params["gamma"].reshape(-1, 1)                 # (H, A)
        b2f = params["b2"] + params["beta"] @ params["w2"]                  # (1, A)
    else:
        w2f = params["w2"]
        b2f = params["b2"]

    return dict(w1=w1f, b1=params["b1"], wg=wg, bg=bg, w2=w2f, b2=b2f)


# -----------------------------------------------------------------------------
# Wrapper: row tiling (no padding) + pallas_call
# -----------------------------------------------------------------------------
def nrnn_agent_forward(inputs, hidden_state, fused, use_layer_norm=True,
                       block_rows=2048):
    b, a, e = inputs.shape
    H = fused["b1"].shape[-1]
    A = fused["w2"].shape[-1]

    n = b * a
    x2 = inputs.reshape(n, e).astype(jnp.float32)
    h2 = hidden_state.reshape(n, H).astype(jnp.float32)

    # Row-block choice (no jnp.pad: grid = cdiv, ragged last block handled by
    # Pallas boundary masking — OOB input rows are garbage, OOB output rows are
    # dropped, and every op in the kernel is row-local).
    block_rows = max(8, (block_rows // 8) * 8)
    if n <= block_rows:
        if n <= 1024:
            NB = n                                  # tiny: single full block
        else:
            NB = (((n + 1) // 2) + 7) // 8 * 8      # >=2 steps so v7x megacore splits
    else:
        NB = block_rows
    grid = ((n + NB - 1) // NB,)

    in_specs = [
        pl.BlockSpec((NB, e), lambda i: (i, 0)),
        pl.BlockSpec((NB, H), lambda i: (i, 0)),
        _rep_spec(fused["w1"]), _rep_spec(fused["b1"]),
        _rep_spec(fused["wg"]), _rep_spec(fused["bg"]),
        _rep_spec(fused["w2"]), _rep_spec(fused["b2"]),
    ]
    out_specs = pl.BlockSpec((NB, H + A), lambda i: (i, 0))
    out_shape = jax.ShapeDtypeStruct((n, H + A), jnp.float32)

    # Advisory cost hint so XLA schedules/overlaps this cheap custom call.
    weight_bytes = 4 * sum(int(v.size) for v in fused.values())
    flops = 2 * n * (e * H + (2 * H) * (4 * H) + H * A) + 12 * n * H
    bytes_accessed = 4 * n * (e + H) + 4 * n * (H + A) + weight_bytes
    cost = pl.CostEstimate(flops=int(flops),
                           transcendentals=int(3 * n * H + n),
                           bytes_accessed=int(bytes_accessed))

    out = pl.pallas_call(
        functools.partial(_agent_kernel, use_layer_norm),
        grid=grid,
        in_specs=in_specs,
        out_specs=out_specs,
        out_shape=out_shape,
        compiler_params=pltpu.CompilerParams(
            dimension_semantics=("parallel",),
            vmem_limit_bytes=32 * 1024 * 1024),
        cost_estimate=cost,
    )(x2, h2,
      fused["w1"], fused["b1"],
      fused["wg"], fused["bg"],
      fused["w2"], fused["b2"])

    hh = out[:, :H].reshape(b, a, H)
    q = out[:, H:].reshape(b, a, A)
    return q, hh


# -----------------------------------------------------------------------------
# Pure-JAX reference (original, un-fused math; for correctness check)
# -----------------------------------------------------------------------------
def reference_forward(inputs, hidden_state, params, use_layer_norm=True):
    b, a, e = inputs.shape
    x = inputs.astype(jnp.float32)
    scale = jnp.ones((e,), jnp.float32)
    scale = scale.at[0].set(1.0 / 15000.0).at[1].set(1.0 / 15000.0)
    scale = scale.at[3].set(1.0 / 15000.0).at[4].set(1.0 / 15000.0)
    scale = scale.at[2].set(1.0 / 7500.0).at[5].set(1.0 / 30000.0)
    x = x * scale
    x = x.at[:, :, 3].add(-x[:, :, 0])
    x = x.at[:, :, 4].add(-x[:, :, 1])
    x = jnp.concatenate([x[:, :, :5], x[:, :, 6:]], axis=-1)

    n = b * a
    x2 = x.reshape(n, e - 1)
    h = hidden_state.reshape(n, -1).astype(jnp.float32)

    xr = jnp.maximum(x2 @ params["w1"] + params["b1"], 0.0)

    def gate(idx):
        gi = xr @ params["w_ih"][idx] + params["b_ih"][idx]
        gh = h @ params["w_hh"][idx] + params["b_hh"][idx]
        return gi, gh

    i_r, h_r = gate(0)
    i_z, h_z = gate(1)
    i_n, h_n = gate(2)
    r = jax.nn.sigmoid(i_r + h_r)
    z = jax.nn.sigmoid(i_z + h_z)
    nn_ = jnp.tanh(i_n + r * h_n)
    hh = (1.0 - z) * nn_ + z * h

    y = hh
    if use_layer_norm:
        mu = jnp.mean(hh, axis=-1, keepdims=True)
        var = jnp.mean((hh - mu) ** 2, axis=-1, keepdims=True)
        y = (hh - mu) * jax.lax.rsqrt(var + 1e-5) * params["gamma"] + params["beta"]

    q = y @ params["w2"] + params["b2"]
    return q.reshape(b, a, -1), hh.reshape(b, a, -1)


# -----------------------------------------------------------------------------
# Deterministic parameter init (synthetic; mirrors shapes from __init__).
# gamma/beta are non-trivial so the LayerNorm->fc2 fold is actually exercised.
# -----------------------------------------------------------------------------
def init_params(key, input_shape, hidden_dim, n_actions):
    e1 = input_shape - 1
    ks = jax.random.split(key, 10)
    s = 0.1
    return dict(
        w1=jax.random.normal(ks[0], (e1, hidden_dim), jnp.float32) * s,
        b1=jax.random.normal(ks[1], (1, hidden_dim), jnp.float32) * s,
        w_ih=jax.random.normal(ks[2], (3, hidden_dim, hidden_dim), jnp.float32) * s,
        b_ih=jax.random.normal(ks[3], (3, 1, hidden_dim), jnp.float32) * s,
        w_hh=jax.random.normal(ks[4], (3, hidden_dim, hidden_dim), jnp.float32) * s,
        b_hh=jax.random.normal(ks[5], (3, 1, hidden_dim), jnp.float32) * s,
        w2=jax.random.normal(ks[6], (hidden_dim, n_actions), jnp.float32) * s,
        b2=jax.random.normal(ks[7], (1, n_actions), jnp.float32) * s,
        gamma=1.0 + 0.1 * jax.random.normal(ks[8], (1, hidden_dim), jnp.float32),
        beta=0.05 * jax.random.normal(ks[9], (1, hidden_dim), jnp.float32),
    )


if __name__ == "__main__":
    key = jax.random.PRNGKey(0)
    kp, ki, kh = jax.random.split(key, 3)

    b, a = 2, 4                # batch, agents  -> N = 8 rows
    input_shape = 12           # raw obs features (fc1 consumes input_shape - 1)
    hidden_dim = 32
    n_actions = 8

    params = init_params(kp, input_shape, hidden_dim, n_actions)
    inputs = jax.random.uniform(ki, (b, a, input_shape), jnp.float32, 0.0, 20000.0)
    hidden = jax.random.normal(kh, (b, a, hidden_dim), jnp.float32) * 0.1

    ok = True

    # Small single-block path, with and without LayerNorm.
    for use_ln in (True, False):
        fused = prepare_fused_params(params, use_layer_norm=use_ln)   # offline prep
        q, hh = nrnn_agent_forward(inputs, hidden, fused, use_layer_norm=use_ln)
        jax.block_until_ready((q, hh))

        q_ref, hh_ref = reference_forward(inputs, hidden, params, use_layer_norm=use_ln)
        assert q.shape == (b, a, n_actions) and hh.shape == (b, a, hidden_dim)
        ok &= bool(jnp.allclose(q, q_ref, atol=1e-4, rtol=1e-4))
        ok &= bool(jnp.allclose(hh, hh_ref, atol=1e-4, rtol=1e-4))

    # Multi-block path with a ragged last block (exercises the no-pad boundary
    # handling and the "parallel" row-block grid): n = 39 rows, 16-row blocks.
    b2_, a2_ = 3, 13
    inputs2 = jax.random.uniform(jax.random.PRNGKey(1), (b2_, a2_, input_shape),
                                 jnp.float32, 0.0, 20000.0)
    hidden2 = jax.random.normal(jax.random.PRNGKey(2), (b2_, a2_, hidden_dim),
                                jnp.float32) * 0.1
    fused = prepare_fused_params(params, use_layer_norm=True)
    q, hh = nrnn_agent_forward(inputs2, hidden2, fused, use_layer_norm=True,
                               block_rows=16)
    jax.block_until_ready((q, hh))
    q_ref, hh_ref = reference_forward(inputs2, hidden2, params, use_layer_norm=True)
    ok &= bool(jnp.allclose(q, q_ref, atol=1e-4, rtol=1e-4))
    ok &= bool(jnp.allclose(hh, hh_ref, atol=1e-4, rtol=1e-4))

    assert ok
    print("KERNEL_OK")
</pallas_src>

<mosaic_0001>
module attributes {stable_mosaic.version = 11 : i64} {
  func.func @_agent_kernel(%arg0: i32, %arg1: memref<8x12xf32, #tpu.memory_space<vmem>>, %arg2: memref<8x32xf32, #tpu.memory_space<vmem>>, %arg3: memref<12x32xf32, #tpu.memory_space<vmem>>, %arg4: memref<1x32xf32, #tpu.memory_space<vmem>>, %arg5: memref<64x128xf32, #tpu.memory_space<vmem>>, %arg6: memref<1x128xf32, #tpu.memory_space<vmem>>, %arg7: memref<32x8xf32, #tpu.memory_space<vmem>>, %arg8: memref<1x8xf32, #tpu.memory_space<vmem>>, %arg9: memref<8x40xf32, #tpu.memory_space<vmem>>) attributes {dimension_semantics = [#tpu.dimension_semantics<parallel>], iteration_bounds = array<i64: 1>, scalar_prefetch = 0 : i64, scratch_operands = 0 : i64, tpu.core_type = #tpu.core_type<tc>, window_params = [{transform_indices = @transform_0, window_bounds = array<i64: 8, 12>}, {transform_indices = @transform_1, window_bounds = array<i64: 8, 32>}, {pipeline_mode = #tpu.pipeline_mode<synchronous>, transform_indices = @transform_2, window_bounds = array<i64: 12, 32>}, {pipeline_mode = #tpu.pipeline_mode<synchronous>, transform_indices = @transform_3, window_bounds = array<i64: 1, 32>}, {pipeline_mode = #tpu.pipeline_mode<synchronous>, transform_indices = @transform_4, window_bounds = array<i64: 64, 128>}, {pipeline_mode = #tpu.pipeline_mode<synchronous>, transform_indices = @transform_5, window_bounds = array<i64: 1, 128>}, {pipeline_mode = #tpu.pipeline_mode<synchronous>, transform_indices = @transform_6, window_bounds = array<i64: 32, 8>}, {pipeline_mode = #tpu.pipeline_mode<synchronous>, transform_indices = @transform_7, window_bounds = array<i64: 1, 8>}, {transform_indices = @transform_8, window_bounds = array<i64: 8, 40>}]} {
    %c0 = arith.constant 0 : index
    %c0_0 = arith.constant 0 : index
    %0 = vector.load %arg1[%c0, %c0_0] : memref<8x12xf32, #tpu.memory_space<vmem>>, vector<8x12xf32>
    %c0_1 = arith.constant 0 : index
    %c0_2 = arith.constant 0 : index
    %1 = vector.load %arg2[%c0_1, %c0_2] : memref<8x32xf32, #tpu.memory_space<vmem>>, vector<8x32xf32>
    %c0_3 = arith.constant 0 : index
    %c0_4 = arith.constant 0 : index
    %2 = vector.load %arg3[%c0_3, %c0_4] : memref<12x32xf32, #tpu.memory_space<vmem>>, vector<12x32xf32>
    %cst = arith.constant dense<0.000000e+00> : vector<8x32xf32>
    %3 = tpu.matmul %0, %2, %cst {dimension_numbers = #tpu.dot_dimension_numbers<[1], [0], [0], [1], [0, 0, 1, 1], [], []>} : vector<8x12xf32>, vector<12x32xf32>, vector<8x32xf32> -> vector<8x32xf32>
    %c0_5 = arith.constant 0 : index
    %c0_6 = arith.constant 0 : index
    %4 = vector.load %arg4[%c0_5, %c0_6] : memref<1x32xf32, #tpu.memory_space<vmem>>, vector<1x32xf32>
    %5 = vector.broadcast %4 : vector<1x32xf32> to vector<8x32xf32>
    %6 = arith.addf %3, %5 : vector<8x32xf32>
    %cst_7 = arith.constant 0.000000e+00 : f32
    %7 = vector.broadcast %cst_7 : f32 to vector<8x32xf32>
    %8 = arith.maximumf %6, %7 : vector<8x32xf32>
    %9 = tpu.concatenate %8, %1 in 1 : vector<8x32xf32>, vector<8x32xf32> -> vector<8x64xf32>
    %c0_8 = arith.constant 0 : index
    %c0_9 = arith.constant 0 : index
    %10 = vector.load %arg5[%c0_8, %c0_9] : memref<64x128xf32, #tpu.memory_space<vmem>>, vector<64x128xf32>
    %cst_10 = arith.constant dense<0.000000e+00> : vector<8x128xf32>
    %11 = tpu.matmul %9, %10, %cst_10 {dimension_numbers = #tpu.dot_dimension_numbers<[1], [0], [0], [1], [0, 0, 1, 1], [], []>} : vector<8x64xf32>, vector<64x128xf32>, vector<8x128xf32> -> vector<8x128xf32>
    %c0_11 = arith.constant 0 : index
    %c0_12 = arith.constant 0 : index
    %12 = vector.load %arg6[%c0_11, %c0_12] : memref<1x128xf32, #tpu.memory_space<vmem>>, vector<1x128xf32>
    %13 = vector.broadcast %12 : vector<1x128xf32> to vector<8x128xf32>
    %14 = arith.addf %11, %13 : vector<8x128xf32>
    %15 = vector.extract_strided_slice %14 {offsets = [0, 0], sizes = [8, 64], strides = [1, 1]} : vector<8x128xf32> to vector<8x64xf32>
    %16 = arith.negf %15 : vector<8x64xf32>
    %17 = math.exp %16 : vector<8x64xf32>
    %cst_13 = arith.constant 1.000000e+00 : f32
    %18 = vector.broadcast %cst_13 : f32 to vector<8x64xf32>
    %19 = arith.addf %18, %17 : vector<8x64xf32>
    %20 = arith.divf %18, %19 : vector<8x64xf32>
    %21 = vector.extract_strided_slice %20 {offsets = [0, 0], sizes = [8, 32], strides = [1, 1]} : vector<8x64xf32> to vector<8x32xf32>
    %22 = vector.extract_strided_slice %20 {offsets = [0, 32], sizes = [8, 32], strides = [1, 1]} : vector<8x64xf32> to vector<8x32xf32>
    %23 = vector.extract_strided_slice %14 {offsets = [0, 64], sizes = [8, 32], strides = [1, 1]} : vector<8x128xf32> to vector<8x32xf32>
    %24 = vector.extract_strided_slice %14 {offsets = [0, 96], sizes = [8, 32], strides = [1, 1]} : vector<8x128xf32> to vector<8x32xf32>
    %25 = arith.mulf %21, %24 : vector<8x32xf32>
    %26 = arith.addf %23, %25 : vector<8x32xf32>
    %27 = math.tanh %26 : vector<8x32xf32>
    %cst_14 = arith.constant 1.000000e+00 : f32
    %28 = vector.broadcast %cst_14 : f32 to vector<8x32xf32>
    %29 = arith.subf %28, %22 : vector<8x32xf32>
    %30 = arith.mulf %29, %27 : vector<8x32xf32>
    %31 = arith.mulf %22, %1 : vector<8x32xf32>
    %32 = arith.addf %30, %31 : vector<8x32xf32>
    %cst_15 = arith.constant dense<0.000000e+00> : vector<8xf32>
    %33 = vector.multi_reduction <add>, %32, %cst_15 [1] : vector<8x32xf32> to vector<8xf32>
    %34 = vector.shape_cast %33 : vector<8xf32> to vector<8x1xf32>
    %cst_16 = arith.constant 3.200000e+01 : f32
    %35 = vector.broadcast %cst_16 : f32 to vector<8x1xf32>
    %36 = arith.divf %34, %35 : vector<8x1xf32>
    %37 = vector.broadcast %36 : vector<8x1xf32> to vector<8x32xf32>
    %38 = arith.subf %32, %37 : vector<8x32xf32>
    %39 = arith.mulf %38, %38 : vector<8x32xf32>
    %cst_17 = arith.constant dense<0.000000e+00> : vector<8xf32>
    %40 = vector.multi_reduction <add>, %39, %cst_17 [1] : vector<8x32xf32> to vector<8xf32>
    %41 = vector.shape_cast %40 : vector<8xf32> to vector<8x1xf32>
    %cst_18 = arith.constant 3.200000e+01 : f32
    %42 = vector.broadcast %cst_18 : f32 to vector<8x1xf32>
    %43 = arith.divf %41, %42 : vector<8x1xf32>
    %44 = vector.broadcast %36 : vector<8x1xf32> to vector<8x32xf32>
    %45 = arith.subf %32, %44 : vector<8x32xf32>
    %cst_19 = arith.constant 9.99999974E-6 : f32
    %46 = vector.broadcast %cst_19 : f32 to vector<8x1xf32>
    %47 = arith.addf %43, %46 : vector<8x1xf32>
    %48 = math.rsqrt %47 : vector<8x1xf32>
    %49 = vector.broadcast %48 : vector<8x1xf32> to vector<8x32xf32>
    %50 = arith.mulf %45, %49 : vector<8x32xf32>
    %c0_20 = arith.constant 0 : index
    %c0_21 = arith.constant 0 : index
    %51 = vector.load %arg7[%c0_20, %c0_21] : memref<32x8xf32, #tpu.memory_space<vmem>>, vector<32x8xf32>
    %cst_22 = arith.constant dense<0.000000e+00> : vector<8x8xf32>
    %52 = tpu.matmul %50, %51, %cst_22 {dimension_numbers = #tpu.dot_dimension_numbers<[1], [0], [0], [1], [0, 0, 1, 1], [], []>} : vector<8x32xf32>, vector<32x8xf32>, vector<8x8xf32> -> vector<8x8xf32>
    %c0_23 = arith.constant 0 : index
    %c0_24 = arith.constant 0 : index
    %53 = vector.load %arg8[%c0_23, %c0_24] : memref<1x8xf32, #tpu.memory_space<vmem>>, vector<1x8xf32>
    %54 = vector.broadcast %53 : vector<1x8xf32> to vector<8x8xf32>
    %55 = arith.addf %52, %54 : vector<8x8xf32>
    %56 = tpu.concatenate %32, %55 in 1 : vector<8x32xf32>, vector<8x8xf32> -> vector<8x40xf32>
    %c0_25 = arith.constant 0 : index
    %c0_26 = arith.constant 0 : index
    %57 = vector.load %arg9[%c0_25, %c0_26] : memref<8x40xf32, #tpu.memory_space<vmem>>, vector<8x40xf32>
    tpu.vector_store %arg9[%c0_25, %c0_26], %56 {strides = array<i32>} : memref<8x40xf32, #tpu.memory_space<vmem>>, vector<8x40xf32>,
    return
  }
  func.func @transform_0(%arg0: i32) -> (i32, i32) {
    %c0_i32 = arith.constant 0 : i32
    %c0_i32_0 = arith.constant 0 : i32
    return %arg0, %c0_i32 : i32, i32
  }
  func.func @transform_1(%arg0: i32) -> (i32, i32) {
    %c0_i32 = arith.constant 0 : i32
    %c0_i32_0 = arith.constant 0 : i32
    return %arg0, %c0_i32 : i32, i32
  }
  func.func @transform_2(%arg0: i32) -> (i32, i32) {
    %c0_i32 = arith.constant 0 : i32
    %c0_i32_0 = arith.constant 0 : i32
    %c0_i32_1 = arith.constant 0 : i32
    return %c0_i32, %c0_i32_0 : i32, i32
  }
  func.func @transform_3(%arg0: i32) -> (i32, i32) {
    %c0_i32 = arith.constant 0 : i32
    %c0_i32_0 = arith.constant 0 : i32
    %c0_i32_1 = arith.constant 0 : i32
    return %c0_i32, %c0_i32_0 : i32, i32
  }
  func.func @transform_4(%arg0: i32) -> (i32, i32) {
    %c0_i32 = arith.constant 0 : i32
    %c0_i32_0 = arith.constant 0 : i32
    %c0_i32_1 = arith.constant 0 : i32
    return %c0_i32, %c0_i32_0 : i32, i32
  }
  func.func @transform_5(%arg0: i32) -> (i32, i32) {
    %c0_i32 = arith.constant 0 : i32
    %c0_i32_0 = arith.constant 0 : i32
    %c0_i32_1 = arith.constant 0 : i32
    return %c0_i32, %c0_i32_0 : i32, i32
  }
  func.func @transform_6(%arg0: i32) -> (i32, i32) {
    %c0_i32 = arith.constant 0 : i32
    %c0_i32_0 = arith.constant 0 : i32
    %c0_i32_1 = arith.constant 0 : i32
    return %c0_i32, %c0_i32_0 : i32, i32
  }
  func.func @transform_7(%arg0: i32) -> (i32, i32) {
    %c0_i32 = arith.constant 0 : i32
    %c0_i32_0 = arith.constant 0 : i32
    %c0_i32_1 = arith.constant 0 : i32
    return %c0_i32, %c0_i32_0 : i32, i32
  }
  func.func @transform_8(%arg0: i32) -> (i32, i32) {
    %c0_i32 = arith.constant 0 : i32
    %c0_i32_0 = arith.constant 0 : i32
    return %arg0, %c0_i32 : i32, i32
  }
}

</mosaic_0001>

<llo_original>
// kernel: tpu_custom_call.1
$region0: #{tpu_custom_call.1}
  #allocation0 [shape = 'u32[]', space=smem, size = 0x4, offset = 0x4, fixed_abs, tag = 'smem constant byte address 0x4 - core index']
  #allocation1 [shape = 'u32[72,128]{1,0:T(1,128)}', space=vmem, size = 0x9000, scoped, tag = 'internal scratch']
  %s0 = inlined_call_operand.vmem [shape: f32[8,12], index: 0, kind: input, shape index: {}]
  %s1 = inlined_call_operand.vmem [shape: f32[8,32], index: 1, kind: input, shape index: {}]
  %s2 = inlined_call_operand.vmem [shape: f32[12,32], index: 2, kind: input, shape index: {}]
  %s3 = inlined_call_operand.vmem [shape: f32[1,32], index: 3, kind: input, shape index: {}]
  %s4 = inlined_call_operand.hbm [shape: f32[64,128], index: 4, kind: input, shape index: {}]
  %s5 = inlined_call_operand.vmem [shape: f32[1,128], index: 5, kind: input, shape index: {}]
  %s6 = inlined_call_operand.vmem [shape: f32[32,8], index: 6, kind: input, shape index: {}]
  %s7 = inlined_call_operand.vmem [shape: f32[1,8], index: 7, kind: input, shape index: {}]
  %s8 = inlined_call_operand.hbm [shape: f32[8,40], index: 8, kind: output, shape index: {}]
  %s9 = sld [smem:[#allocation0]]
  $region46: #{tpu_custom_call.1} parent=0
    _
  %s11 = ssub.s32 1, %s9
  %s12 = scalar_select 0, %s11, %s9
  $region1: #{tpu_custom_call.1} parent=0
    #allocation2 [shape = 'u8[32768]{0}', space=vmem, size = 0x8000, scoped, tag = 'input window, operand 4, single buffered']
    #allocation3 [shape = 's32[1]{0}', space=sflag, size = 0x4, scoped, tag = 'scoped memory for tpu_custom_call.1']
    #allocation4 [shape = 's32[1]{0}', space=sflag, size = 0x4, scoped, tag = 'scoped memory for tpu_custom_call.1']
    #allocation5 [shape = 'u8[4096]{0}', space=vmem, size = 0x1000, scoped, tag = 'output window, operand 0, single buffered']
    %13 = vsyncpa [#allocation3], 0
    %14 = vsyncpa [#allocation4], 0
    // Predicated region
    $region2: #{tpu_custom_call.1} parent=1 // pred_check
      _
    $region3: #{tpu_custom_call.1} parent=1 // pred_check_branch
      %16 = sbr.rel (0) target = $region5
    $region4: #{tpu_custom_call.1} parent=1 // pred_region
      _
    $region5: #{tpu_custom_call.1} parent=1 // pred_fallthru
      _
    // Predicated region
    $region6: #{tpu_custom_call.1} parent=1 // pred_check
      _
    $region7: #{tpu_custom_call.1} parent=1 // pred_check_branch
      %18 = sbr.rel (0) target = $region9
    $region8: #{tpu_custom_call.1} parent=1 // pred_region
      _
    $region9: #{tpu_custom_call.1} parent=1 // pred_fallthru
      _
    // Predicated region
    $region10: #{tpu_custom_call.1} parent=1 // pred_check
      _
    $region11: #{tpu_custom_call.1} parent=1 // pred_check_branch
      %20 = sbr.rel (0) target = $region13
    $region12: #{tpu_custom_call.1} parent=1 // pred_region
      _
    $region13: #{tpu_custom_call.1} parent=1 // pred_fallthru
      _
    // Predicated region
    $region14: #{tpu_custom_call.1} parent=1 // pred_check
      _
    $region15: #{tpu_custom_call.1} parent=1 // pred_check_branch
      %22 = sbr.rel (0) target = $region17
    $region16: #{tpu_custom_call.1} parent=1 // pred_region
      _
    $region17: #{tpu_custom_call.1} parent=1 // pred_fallthru
      _
    // Predicated region
    $region18: #{tpu_custom_call.1} parent=1 // pred_check
      _
    $region19: #{tpu_custom_call.1} parent=1 // pred_check_branch
      %24 = sbr.rel (0) target = $region21
    $region20: #{tpu_custom_call.1} parent=1 // pred_region
      %26 = vsyncadd [#allocation3], 0
      %s27 = sshll.u32 %s4, 4
      %s28 = int_to_ptr.hbm [resolvable:$true] %s27
      %s29 = sshll.u32 [#allocation2], 4
      %s30 = int_to_ptr.vmem [resolvable:$true] %s29
      %35 = dma.hbm_to_vmem [thread:$0]  %s28, 1024, %s30, [#allocation3], 128, 128, 8
    $region21: #{tpu_custom_call.1} parent=1 // pred_fallthru
      _
    // Predicated region
    $region22: #{tpu_custom_call.1} parent=1 // pred_check
      _
    $region23: #{tpu_custom_call.1} parent=1 // pred_check_branch
      %37 = sbr.rel (0) target = $region25
    $region24: #{tpu_custom_call.1} parent=1 // pred_region
      _
    $region25: #{tpu_custom_call.1} parent=1 // pred_fallthru
      _
    // Predicated region
    $region26: #{tpu_custom_call.1} parent=1 // pred_check
      _
    $region27: #{tpu_custom_call.1} parent=1 // pred_check_branch
      %39 = sbr.rel (0) target = $region29
    $region28: #{tpu_custom_call.1} parent=1 // pred_region
      _
    $region29: #{tpu_custom_call.1} parent=1 // pred_fallthru
      _
    // Predicated region
    $region30: #{tpu_custom_call.1} parent=1 // pred_check
      _
    $region31: #{tpu_custom_call.1} parent=1 // pred_check_branch
      %41 = sbr.rel (0) target = $region33
    $region32: #{tpu_custom_call.1} parent=1 // pred_region
      _
    $region33: #{tpu_custom_call.1} parent=1 // pred_fallthru
      _
    // Predicated region
    $region34: #{tpu_custom_call.1} parent=1 // pred_check
      _
    $region35: #{tpu_custom_call.1} parent=1 // pred_check_branch
      %43 = sbr.rel (0) target = $region37
    $region36: #{tpu_custom_call.1} parent=1 // pred_region
      %45 = dma.done [#allocation3], 1024
    $region37: #{tpu_custom_call.1} parent=1 // pred_fallthru
      _
    %v46 = vld [vmem:[%s0] sm:$0xff]
    %v47 = vld [vmem:[%s1] sm:$0xff]
    %v48 = vld [vmem:[%s2] sm:$0xff]
    %v49 = vld [vmem:[%s2 + $0x8] sm:$0xf]
    %v50 = vld [vmem:[%s3] sm:$0x1]
    %v52 = vperm.slane %v50, 0
    %vm54 = vcmask 97280
    %v56 = vsel %vm54, %v46, 0
    %vm58 = vcmask 1043456
    %v60 = vsel %vm58, %v49, 0
    %62 = vmatpush.msra.mxu0 0.0
    %63 = vmatpush.msra.mxu0 0.0
    %64 = vmatpush.msra.mxu0 0.0
    %65 = vmatpush.msra.mxu0 0.0
    %66 = vmatpush.msra.mxu0 0.0
    %67 = vmatpush.msra.mxu0 0.0
    %68 = vmatpush.msra.mxu0 0.0
    %69 = vmatpush.msra.mxu0 0.0
    %70 = vmatpush.msra.mxu0 0.0
    %71 = vmatpush.msra.mxu0 0.0
    %72 = vmatpush.msra.mxu0 0.0
    %73 = vmatpush.msra.mxu0 0.0
    %74 = vmatpush.msra.mxu0 0.0
    %75 = vmatpush.msra.mxu0 0.0
    %76 = vmatpush.msra.mxu0 %v60
    %77 = vmatpush.msra.mxu0 %v48
    %78 = vmatmul.f32.gmra.mxu0 %v56
    %v79 = vpop.f32.mrf.mxu0
    %v80 = vadd.f32 %v52, %v79
    %81 = vdwg.mxu0
    %v82 = vmax.f32 %v80, 0.0
    %84 = vrot.lane.b32.xlu0 %v47, 32
    %v85 = vpop.permute.xlu0 %84
    %vm87 = vcmask 261120
    %v88 = vsel %vm87, %v82, %v85
    %v89 = vld [vmem:[#allocation2] sm:$0xff]
    %v90 = vld [vmem:[#allocation2 + $0x8] sm:$0xff]
    %v91 = vld [vmem:[#allocation2 + $0x10] sm:$0xff]
    %v92 = vld [vmem:[#allocation2 + $0x18] sm:$0xff]
    %v93 = vld [vmem:[#allocation2 + $0x20] sm:$0xff]
    %v94 = vld [vmem:[#allocation2 + $0x28] sm:$0xff]
    %v95 = vld [vmem:[#allocation2 + $0x30] sm:$0xff]
    %v96 = vld [vmem:[#allocation2 + $0x38] sm:$0xff]
    %v97 = vld [vmem:[%s5] sm:$0x1]
    %v99 = vperm.slane %v97, 0
    %vm101 = vcmask 523264
    %v103 = vsel %vm101, %v88, 0
    %105 = vmatpush.msra.mxu0 0.0
    %106 = vmatpush.msra.mxu0 0.0
    %107 = vmatpush.msra.mxu0 0.0
    %108 = vmatpush.msra.mxu0 0.0
    %109 = vmatpush.msra.mxu0 0.0
    %110 = vmatpush.msra.mxu0 0.0
    %111 = vmatpush.msra.mxu0 0.0
    %112 = vmatpush.msra.mxu0 0.0
    %113 = vmatpush.msra.mxu0 %v96
    %114 = vmatpush.msra.mxu0 %v95
    %115 = vmatpush.msra.mxu0 %v94
    %116 = vmatpush.msra.mxu0 %v93
    %117 = vmatpush.msra.mxu0 %v92
    %118 = vmatpush.msra.mxu0 %v91
    %119 = vmatpush.msra.mxu0 %v90
    %120 = vmatpush.msra.mxu0 %v89
    %121 = vmatmul.f32.gmra.mxu0 %v103
    %v122 = vpop.f32.mrf.mxu0
    %v123 = vadd.f32 %v99, %v122
    %124 = vdwg.mxu0
    %v125 = vxor.u32 %v123, 2147483648
    %v126 = vmul.f32 %v125, 1.442695
    %v127 = vpow.pop %v126
    %v128 = vadd.f32 %v127, 1.0
    %v129 = vrcp.pop %v128
    %v130 = vmul.f32 %v128, %v129
    %v131 = vsub.f32 1.0, %v130
    %v132 = vmul.f32 %v129, %v131
    %v133 = vadd.f32 %v129, %v132
    %vm134 = vweird.f32 %v128
    %vm135 = vweird.f32 %v129
    %vm136 = vmor %vm134, %vm135
    %v137 = vsel %vm136, %v129, %v133
    %v138 = vand.u32 2147483647, %v128
    %vm139 = vcmp.eq.f32.partialorder %v138, 8.507059e+37
    %v140 = vand.u32 %v128, 2147483648
    %v141 = vor.u32 1.1754944e-38, %v140
    %v142 = vsel %vm139, %v141, %v137
    %v143 = vmul.f32 1.0, %v142
    %145 = vrot.lane.b32.xlu0 %v123, 32
    %v146 = vpop.permute.xlu0 %145
    %v148 = vmul.f32 %v143, %v146
    %150 = vrot.lane.b32.xlu0 %v148, 64
    %v151 = vpop.permute.xlu0 %150
    %v153 = vadd.f32 %v123, %v151
    %v154 = vtanh.pop %v153
    %v155 = vsub.f32 1.0, %v143
    %157 = vrot.lane.b32.xlu0 %v154, 96
    %v158 = vpop.permute.xlu0 %157
    %v160 = vmul.f32 %v155, %v158
    %v161 = vmul.f32 %v143, %v85
    %v162 = vadd.f32 %v160, %v161
    %164 = vrot.lane.b32.xlu0 %v162, 96
    %v165 = vpop.permute.xlu0 %164
    %v167 = vsel %vm87, %v165, 0.0
    %168 = vadd.xlane.f32.xlu0 %v167
    %v169 = vpop.xlane.xlu0 %168
    %v170 = vrcp.pop 32.0
    %v171 = vmul.f32 32.0, %v170
    %v172 = vsub.f32 1.0, %v171
    %v173 = vmul.f32 %v170, %v172
    %v174 = vadd.f32 %v170, %v173
    %vm175 = vweird.f32 %v170
    %v176 = vsel %vm175, %v170, %v174
    %v177 = vmul.f32 %v169, %v176
    %v178 = vsub.f32 %v162, %v177
    %v179 = vmul.f32 %v178, %v178
    %181 = vrot.lane.b32.xlu0 %v179, 96
    %v182 = vpop.permute.xlu0 %181
    %v184 = vsel %vm87, %v182, 0.0
    %185 = vadd.xlane.f32.xlu0 %v184
    %v186 = vpop.xlane.xlu0 %185
    %v187 = vmul.f32 %v186, %v176
    %v188 = vadd.f32 %v187, 1e-05
    %v189 = vrsqrt.pop %v188
    %v190 = vmul.f32 %v189, %v188
    %v191 = vmul.f32 %v190, %v189
    %v192 = vmul.f32 0.5, %v191
    %v193 = vsub.f32 1.5, %v192
    %v194 = vmul.f32 %v189, %v193
    %vm195 = vweird.f32 %v188
    %vm196 = vweird.f32 %v189
    %vm197 = vmor %vm195, %vm196
    %v198 = vsel %vm197, %v189, %v194
    %v199 = vmul.f32 %v178, %v198
    %v200 = vld [vmem:[%s6] sm:$0xff]
    %v201 = vld [vmem:[%s6 + $0x8] sm:$0xff]
    %v202 = vld [vmem:[%s6 + $0x10] sm:$0xff]
    %v203 = vld [vmem:[%s6 + $0x18] sm:$0xff]
    %v204 = vld [vmem:[%s7] sm:$0x1]
    %v206 = vperm.slane %v204, 0
    %209 = vrot.lane.b32.xlu0 %v199, 96
    %v210 = vpop.permute.xlu0 %209
    %v211 = vsel %vm87, %v210, 0
    %213 = vmatpush.msra.mxu0 0.0
    %214 = vmatpush.msra.mxu0 0.0
    %215 = vmatpush.msra.mxu0 0.0
    %216 = vmatpush.msra.mxu0 0.0
    %217 = vmatpush.msra.mxu0 0.0
    %218 = vmatpush.msra.mxu0 0.0
    %219 = vmatpush.msra.mxu0 0.0
    %220 = vmatpush.msra.mxu0 0.0
    %221 = vmatpush.msra.mxu0 0.0
    %222 = vmatpush.msra.mxu0 0.0
    %223 = vmatpush.msra.mxu0 0.0
    %224 = vmatpush.msra.mxu0 0.0
    %225 = vmatpush.msra.mxu0 %v203
    %226 = vmatpush.msra.mxu0 %v202
    %227 = vmatpush.msra.mxu0 %v201
    %228 = vmatpush.msra.mxu0 %v200
    %229 = vmatmul.f32.gmra.mxu0 %v211
    %v230 = vpop.f32.mrf.mxu0
    %v231 = vadd.f32 %v206, %v230
    %232 = vdwg.mxu0
    %234 = vrot.lane.b32.xlu0 %v231, 32
    %v235 = vpop.permute.xlu0 %234
    %v237 = vsel %vm87, %v165, %v235
    %vm238 = vcmask 326656
    %239 = vst.msk [vmem:[#allocation5] sm:$0xff] %vm238, %v237
    // Predicated region
    $region38: #{tpu_custom_call.1} parent=1 // pred_check
      _
    $region39: #{tpu_custom_call.1} parent=1 // pred_check_branch
      %241 = sbr.rel (0) target = $region41
    $region40: #{tpu_custom_call.1} parent=1 // pred_region
      %243 = vsyncadd [#allocation4], 0
      %s245 = sshll.u32 [#allocation5], 4
      %s246 = int_to_ptr.vmem [resolvable:$true] %s245
      %s247 = sshll.u32 %s8, 4
      %s248 = int_to_ptr.hbm [resolvable:$true] %s247
      %250 = dma.vmem_to_hbm [thread:$0]  %s246, 128, %s248, [#allocation4]
    $region41: #{tpu_custom_call.1} parent=1 // pred_fallthru
      _
    // Predicated region
    $region42: #{tpu_custom_call.1} parent=1 // pred_check
      _
    $region43: #{tpu_custom_call.1} parent=1 // pred_check_branch
      %252 = sbr.rel (0) target = $region45
    $region44: #{tpu_custom_call.1} parent=1 // pred_region
      %254 = dma.done [#allocation4], 128
    $region45: #{tpu_custom_call.1} parent=1 // pred_fallthru
      _
    %255 = vsyncpa [#allocation3], 1
    %256 = vsyncpa [#allocation4], 1

</llo_original>
